<compile_context>
chip_gen: v7x
topology: tpu7x:2x2x1
jax: 0.10.0
libtpu: 0.0.40
codegen_flags: <defaults>
</compile_context>

<pallas_src>
import jax
import jax.numpy as jnp
from jax.experimental import pallas as pl
from jax.experimental.pallas import tpu as pltpu

PAD_ID = 0
MASK_ID = 3
# torch.nn.CosineSimilarity eps.  NOTE: torch clamps the norm *product* with
# eps; here each norm is clamped separately (centers pre-clamped in the
# wrapper, reps clamped in-kernel) -- identical except for near-zero vectors.
COS_EPS = 1e-8


def _first_argmax_sublanes(x):
    """x: (Cp, TB). Index of the first maximum along axis 0 -> (1, TB) int32."""
    m = jnp.max(x, axis=0, keepdims=True)
    idx = jax.lax.broadcasted_iota(jnp.int32, x.shape, 0)
    cand = jnp.where(x == m, idx, jnp.int32(2 ** 30))
    return jnp.min(cand, axis=0, keepdims=True)


def spcl_kernel(feat_ref,      # (D, TB) f32  gathered [MASK] hidden rows, batch on lanes
                gw_ref,        # (D, D)  bf16 g weight, torch (out, in) layout
                gb_ref,        # (D, 1)  f32  g bias column
                wcls_ref,      # (2Cp,D) bf16 stacked [normalized centers ; predictor W]
                cbias_ref,     # (2Cp,1) f32  [-2*(1-mask) | -1e30 pad ; pred_b | -1e30 pad]
                out_ref):      # (2, TB) int32: row0 = direct, row1 = cluster
    cp = wcls_ref.shape[0] // 2

    # ---- g: Linear(D, D), batch on lanes: reps[o, b] -------------------------
    feat_bf = feat_ref[...].astype(jnp.bfloat16)
    reps = jnp.dot(gw_ref[...], feat_bf,
                   preferred_element_type=jnp.float32) + gb_ref[...]     # (D, TB) f32

    # Exact 1/max(||reps||, eps) per batch column (EUP rsqrt, f32).
    rinv = jax.lax.rsqrt(jnp.maximum(jnp.sum(reps * reps, axis=0, keepdims=True),
                                     COS_EPS * COS_EPS))                 # (1, TB)

    # ---- ONE fused class-space matmul: [centers_n ; predictor_w] @ reps ------
    cls = jnp.dot(wcls_ref[...], reps.astype(jnp.bfloat16),
                  preferred_element_type=jnp.float32)                    # (2Cp, TB)
    cbias = cbias_ref[...]                                               # (2Cp, 1)

    # Top Cp rows: cosine = (cen_n . reps) / ||reps||, then mask penalty.
    sim = cls[:cp] * rinv + cbias[:cp]                                   # (Cp, TB)
    # Bottom Cp rows: predictor logits (+ -1e30 sentinel on padded classes).
    logits = cls[cp:] + cbias[cp:]                                       # (Cp, TB)

    # Lane-dense packed (2, TB) output, two direct row stores (no concatenate).
    out_ref[0:1, :] = _first_argmax_sublanes(logits)                     # direct_outputs
    out_ref[1:2, :] = _first_argmax_sublanes(sim)                        # cluster_outputs


def _stand_in_encoder(params, input_ids):
    # TODO(synk): pretrained f_context_encoder replaced by a deterministic
    # stand-in: token embedding + 0.5 * attention-masked mean-pooled context,
    # so each [MASK] hidden state depends on the whole sentence.
    tok = params["emb"][input_ids]                                       # (B, L, D)
    attn = (input_ids != PAD_ID).astype(jnp.float32)[..., None]          # (B, L, 1)
    ctx = (tok * attn).sum(axis=1, keepdims=True) / jnp.maximum(
        attn.sum(axis=1, keepdims=True), 1.0)                            # (B, 1, D)
    return tok + 0.5 * ctx


def spcl_forward(params, input_ids):
    B, L = input_ids.shape
    D = params["emb"].shape[1]
    cp2 = params["w_cls_bf"].shape[0]                                    # 2 * Cpad

    hidden = _stand_in_encoder(params, input_ids)                        # (B, L, D)

    # First [MASK] position per example (rows with no [MASK] fall back to 0,
    # matching torch .max(1)[1]); gather only those B rows in the wrapper and
    # hand the kernel a lane-major (D, B) slab -> no exposed DMA in-kernel.
    mask_pos = jnp.argmax((input_ids == MASK_ID).astype(jnp.int32), axis=1)
    feat_t = hidden[jnp.arange(B), mask_pos].T                           # (D, B) f32

    tb = B                       # tiny batch -> single grid step (see v7x note)
    grid = (B // tb,)
    const = lambda i: (0, 0)     # grid-invariant weight blocks

    packed = pl.pallas_call(
        spcl_kernel,
        out_shape=jax.ShapeDtypeStruct((2, B), jnp.int32),
        grid_spec=pltpu.PrefetchScalarGridSpec(
            num_scalar_prefetch=0,
            grid=grid,
            in_specs=[
                pl.BlockSpec((D, tb), lambda i: (0, i)),   # gathered features
                pl.BlockSpec((D, D), const),               # g weight (bf16)
                pl.BlockSpec((D, 1), const),               # g bias (f32)
                pl.BlockSpec((cp2, D), const),             # stacked class weight (bf16)
                pl.BlockSpec((cp2, 1), const),             # stacked bias/penalty (f32)
            ],
            out_specs=pl.BlockSpec((2, tb), lambda i: (0, i)),
        ),
        compiler_params=pltpu.CompilerParams(
            dimension_semantics=("parallel",),
            # v7x: physical VMEM is 64 MiB; with realistic D keep this <= ~48 MiB
            # and single-buffer the constant weight blocks (pl.Buffered(1)).
            vmem_limit_bytes=32 * 1024 * 1024,
        ),
        cost_estimate=pl.CostEstimate(
            flops=2 * B * D * D + 2 * B * cp2 * D,
            transcendentals=B,
            bytes_accessed=2 * (D * D + cp2 * D)           # bf16 weights
                           + 4 * (D * B + D + cp2 + 2 * B),  # f32 feats/bias/out
        ),
    )(feat_t, params["g_w_bf"], params["g_b_col"],
      params["w_cls_bf"], params["c_bias_col"])

    return packed[0], packed[1]                            # direct, cluster


def init_params(key, vocab, D, C):
    ks = jax.random.split(key, 5)
    emb = jax.random.normal(ks[0], (vocab, D), jnp.float32) * 0.02
    centers = jax.random.normal(ks[1], (C, D), jnp.float32)   # torch.randn(C,1,D) squeezed
    cmask = jnp.zeros((C,), jnp.float32)                      # torch.zeros(bool)
    g_w = jax.random.normal(ks[2], (D, D), jnp.float32)       # _init_weights: N(0,1), (out,in)
    g_b = jnp.zeros((D,), jnp.float32)                        # bias = 0
    bound = 1.0 / (D ** 0.5)                                  # torch Linear default init
    pred_w = jax.random.uniform(ks[3], (C, D), jnp.float32, -bound, bound)
    pred_b = jax.random.uniform(ks[4], (C,), jnp.float32, -bound, bound)

    # ---- kernel-side packed params -------------------------------------------
    cp = ((C + 7) // 8) * 8                                   # class axis on sublanes
    cen_n = centers / jnp.maximum(
        jnp.linalg.norm(centers, axis=-1, keepdims=True), COS_EPS)
    # Fused class-space weight: rows [0, cp) = normalized centers (cosine head),
    # rows [cp, 2cp) = predictor weight.  Streamed as bf16 (weight-bandwidth
    # bound at small batch); every matmul accumulates in f32.
    w_cls = jnp.zeros((2 * cp, D), jnp.float32)
    w_cls = w_cls.at[:C].set(cen_n).at[cp:cp + C].set(pred_w)
    # Fused additive column, kept f32 (the -1e30 pad sentinels overflow bf16):
    # rows [0, cp):  -2*(1-centers_mask) for real classes, -1e30 for pad rows,
    # rows [cp,2cp): predictor bias for real classes,       -1e30 for pad rows.
    c_bias = jnp.full((2 * cp, 1), -1e30, jnp.float32)
    c_bias = c_bias.at[:C, 0].set(-2.0 * (1.0 - cmask)).at[cp:cp + C, 0].set(pred_b)

    return dict(
        # reference-side parameters
        emb=emb, centers=centers, cmask=cmask, pred_b=pred_b,
        # kernel-side parameters (bf16 weights, f32 bias columns)
        g_w_bf=g_w.astype(jnp.bfloat16), g_b_col=g_b.reshape(D, 1),
        w_cls_bf=w_cls.astype(jnp.bfloat16), c_bias_col=c_bias,
    )


def spcl_reference(params, input_ids):
    """Pure-JAX mirror of the torch forward semantics, using the same bf16
    weight quantization the kernel streams (f32 accumulation), so the integer
    argmax outputs can be compared exactly."""
    B, L = input_ids.shape
    C = params["centers"].shape[0]
    cp = params["w_cls_bf"].shape[0] // 2

    hidden = _stand_in_encoder(params, input_ids)
    mask_pos = jnp.argmax((input_ids == MASK_ID).astype(jnp.int32), axis=1)
    feat = hidden[jnp.arange(B), mask_pos]                               # (B, D)

    reps = jnp.dot(feat.astype(jnp.bfloat16), params["g_w_bf"].T,
                   preferred_element_type=jnp.float32) + params["g_b_col"][:, 0]
    reps_bf = reps.astype(jnp.bfloat16)

    cen_n_bf = params["w_cls_bf"][:C]
    pred_w_bf = params["w_cls_bf"][cp:cp + C]

    rinv = jax.lax.rsqrt(jnp.maximum(jnp.sum(reps * reps, -1, keepdims=True),
                                     COS_EPS * COS_EPS))
    sim = jnp.dot(reps_bf, cen_n_bf.T, preferred_element_type=jnp.float32) * rinv
    # torch: scores (B, C, C) constant over j; -= 2*(1-mask); max over j; argmax over i
    scores = jnp.broadcast_to(sim[:, :, None], (B, C, C))
    outputs = scores - 2.0 * (1.0 - params["cmask"])[None, :, None]
    cluster = jnp.argmax(jnp.max(outputs, axis=-1), axis=-1)

    logits = jnp.dot(reps_bf, pred_w_bf.T,
                     preferred_element_type=jnp.float32) + params["pred_b"]
    direct = jnp.argmax(logits, axis=-1)
    return direct.astype(jnp.int32), cluster.astype(jnp.int32)


if __name__ == "__main__":
    B, L, D, C, VOCAB = 8, 16, 32, 4, 64

    key = jax.random.PRNGKey(0)
    pkey, ikey = jax.random.split(key)
    params = init_params(pkey, VOCAB, D, C)

    input_ids = jax.random.randint(ikey, (B, L), 4, VOCAB, dtype=jnp.int32)
    mask_cols = (jnp.arange(B) % (L - 4)) + 1              # one [MASK] per row
    input_ids = input_ids.at[jnp.arange(B), mask_cols].set(MASK_ID)
    input_ids = input_ids.at[:, L - 2:].set(PAD_ID)        # some padding

    direct, cluster = jax.jit(spcl_forward)(params, input_ids)
    jax.block_until_ready((direct, cluster))

    ref_direct, ref_cluster = spcl_reference(params, input_ids)
    assert direct.shape == (B,) and cluster.shape == (B,)
    assert jnp.array_equal(direct, ref_direct), (direct, ref_direct)
    assert jnp.array_equal(cluster, ref_cluster), (cluster, ref_cluster)
    print("KERNEL_OK")
</pallas_src>

<mosaic_0001>
module attributes {stable_mosaic.version = 11 : i64} {
  func.func @spcl_kernel(%arg0: i32, %arg1: memref<32x8xf32, #tpu.memory_space<vmem>>, %arg2: memref<32x32xbf16, #tpu.memory_space<vmem>>, %arg3: memref<32x1xf32, #tpu.memory_space<vmem>>, %arg4: memref<16x32xbf16, #tpu.memory_space<vmem>>, %arg5: memref<16x1xf32, #tpu.memory_space<vmem>>, %arg6: memref<2x8xi32, #tpu.memory_space<vmem>>) attributes {dimension_semantics = [#tpu.dimension_semantics<parallel>], iteration_bounds = array<i64: 1>, scalar_prefetch = 0 : i64, scratch_operands = 0 : i64, tpu.core_type = #tpu.core_type<tc>, window_params = [{transform_indices = @transform_0, window_bounds = array<i64: 32, 8>}, {pipeline_mode = #tpu.pipeline_mode<synchronous>, transform_indices = @transform_1, window_bounds = array<i64: 32, 32>}, {pipeline_mode = #tpu.pipeline_mode<synchronous>, transform_indices = @transform_2, window_bounds = array<i64: 32, 1>}, {pipeline_mode = #tpu.pipeline_mode<synchronous>, transform_indices = @transform_3, window_bounds = array<i64: 16, 32>}, {pipeline_mode = #tpu.pipeline_mode<synchronous>, transform_indices = @transform_4, window_bounds = array<i64: 16, 1>}, {transform_indices = @transform_5, window_bounds = array<i64: 2, 8>}]} {
    %c0 = arith.constant 0 : index
    %c0_0 = arith.constant 0 : index
    %0 = vector.load %arg1[%c0, %c0_0] : memref<32x8xf32, #tpu.memory_space<vmem>>, vector<32x8xf32>
    %1 = arith.truncf %0 : vector<32x8xf32> to vector<32x8xbf16>
    %c0_1 = arith.constant 0 : index
    %c0_2 = arith.constant 0 : index
    %2 = vector.load %arg2[%c0_1, %c0_2] : memref<32x32xbf16, #tpu.memory_space<vmem>>, vector<32x32xbf16>
    %cst = arith.constant dense<0.000000e+00> : vector<32x8xf32>
    %3 = tpu.matmul %2, %1, %cst {dimension_numbers = #tpu.dot_dimension_numbers<[1], [0], [0], [1], [0, 0, 1, 1], [], []>} : vector<32x32xbf16>, vector<32x8xbf16>, vector<32x8xf32> -> vector<32x8xf32>
    %c0_3 = arith.constant 0 : index
    %c0_4 = arith.constant 0 : index
    %4 = vector.load %arg3[%c0_3, %c0_4] : memref<32x1xf32, #tpu.memory_space<vmem>>, vector<32x1xf32>
    %5 = vector.broadcast %4 : vector<32x1xf32> to vector<32x8xf32>
    %6 = arith.addf %3, %5 : vector<32x8xf32>
    %7 = arith.mulf %6, %6 : vector<32x8xf32>
    %cst_5 = arith.constant dense<0.000000e+00> : vector<8xf32>
    %8 = vector.multi_reduction <add>, %7, %cst_5 [0] : vector<32x8xf32> to vector<8xf32>
    %9 = vector.shape_cast %8 : vector<8xf32> to vector<1x8xf32>
    %cst_6 = arith.constant 1.000000e-16 : f32
    %10 = vector.broadcast %cst_6 : f32 to vector<1x8xf32>
    %11 = arith.maximumf %9, %10 : vector<1x8xf32>
    %12 = math.rsqrt %11 : vector<1x8xf32>
    %c0_7 = arith.constant 0 : index
    %c0_8 = arith.constant 0 : index
    %13 = vector.load %arg4[%c0_7, %c0_8] : memref<16x32xbf16, #tpu.memory_space<vmem>>, vector<16x32xbf16>
    %14 = arith.truncf %6 : vector<32x8xf32> to vector<32x8xbf16>
    %cst_9 = arith.constant dense<0.000000e+00> : vector<16x8xf32>
    %15 = tpu.matmul %13, %14, %cst_9 {dimension_numbers = #tpu.dot_dimension_numbers<[1], [0], [0], [1], [0, 0, 1, 1], [], []>} : vector<16x32xbf16>, vector<32x8xbf16>, vector<16x8xf32> -> vector<16x8xf32>
    %c0_10 = arith.constant 0 : index
    %c0_11 = arith.constant 0 : index
    %16 = vector.load %arg5[%c0_10, %c0_11] : memref<16x1xf32, #tpu.memory_space<vmem>>, vector<16x1xf32>
    %17 = vector.extract_strided_slice %15 {offsets = [0, 0], sizes = [8, 8], strides = [1, 1]} : vector<16x8xf32> to vector<8x8xf32>
    %18 = vector.broadcast %12 : vector<1x8xf32> to vector<8x8xf32>
    %19 = arith.mulf %17, %18 : vector<8x8xf32>
    %20 = vector.extract_strided_slice %16 {offsets = [0, 0], sizes = [8, 1], strides = [1, 1]} : vector<16x1xf32> to vector<8x1xf32>
    %21 = vector.broadcast %20 : vector<8x1xf32> to vector<8x8xf32>
    %22 = arith.addf %19, %21 : vector<8x8xf32>
    %23 = vector.extract_strided_slice %15 {offsets = [8, 0], sizes = [8, 8], strides = [1, 1]} : vector<16x8xf32> to vector<8x8xf32>
    %24 = vector.extract_strided_slice %16 {offsets = [8, 0], sizes = [8, 1], strides = [1, 1]} : vector<16x1xf32> to vector<8x1xf32>
    %25 = vector.broadcast %24 : vector<8x1xf32> to vector<8x8xf32>
    %26 = arith.addf %23, %25 : vector<8x8xf32>
    %cst_12 = arith.constant dense<0xFF800000> : vector<8xf32>
    %27 = vector.multi_reduction <maximumf>, %26, %cst_12 [0] : vector<8x8xf32> to vector<8xf32>
    %28 = vector.shape_cast %27 : vector<8xf32> to vector<1x8xf32>
    %29 = tpu.iota {dimensions = array<i32: 0>} : vector<8x8xi32>
    %30 = vector.broadcast %28 : vector<1x8xf32> to vector<8x8xf32>
    %31 = arith.cmpf oeq, %26, %30 : vector<8x8xf32>
    %c1073741824_i32 = arith.constant 1073741824 : i32
    %32 = vector.broadcast %c1073741824_i32 : i32 to vector<8x8xi32>
    %33 = arith.select %31, %29, %32 : vector<8x8xi1>, vector<8x8xi32>
    %cst_13 = arith.constant dense<2147483647> : vector<8xi32>
    %34 = vector.multi_reduction <minsi>, %33, %cst_13 [0] : vector<8x8xi32> to vector<8xi32>
    %35 = vector.shape_cast %34 : vector<8xi32> to vector<1x8xi32>
    %c0_14 = arith.constant 0 : index
    %c0_15 = arith.constant 0 : index
    %36 = vector.load %arg6[%c0_14, %c0_15] : memref<2x8xi32, #tpu.memory_space<vmem>>, vector<1x8xi32>
    tpu.vector_store %arg6[%c0_14, %c0_15], %35 {strides = array<i32>} : memref<2x8xi32, #tpu.memory_space<vmem>>, vector<1x8xi32>,
    %cst_16 = arith.constant dense<0xFF800000> : vector<8xf32>
    %37 = vector.multi_reduction <maximumf>, %22, %cst_16 [0] : vector<8x8xf32> to vector<8xf32>
    %38 = vector.shape_cast %37 : vector<8xf32> to vector<1x8xf32>
    %39 = tpu.iota {dimensions = array<i32: 0>} : vector<8x8xi32>
    %40 = vector.broadcast %38 : vector<1x8xf32> to vector<8x8xf32>
    %41 = arith.cmpf oeq, %22, %40 : vector<8x8xf32>
    %c1073741824_i32_17 = arith.constant 1073741824 : i32
    %42 = vector.broadcast %c1073741824_i32_17 : i32 to vector<8x8xi32>
    %43 = arith.select %41, %39, %42 : vector<8x8xi1>, vector<8x8xi32>
    %cst_18 = arith.constant dense<2147483647> : vector<8xi32>
    %44 = vector.multi_reduction <minsi>, %43, %cst_18 [0] : vector<8x8xi32> to vector<8xi32>
    %45 = vector.shape_cast %44 : vector<8xi32> to vector<1x8xi32>
    %c1 = arith.constant 1 : index
    %c0_19 = arith.constant 0 : index
    %46 = vector.load %arg6[%c1, %c0_19] : memref<2x8xi32, #tpu.memory_space<vmem>>, vector<1x8xi32>
    tpu.vector_store %arg6[%c1, %c0_19], %45 {strides = array<i32>} : memref<2x8xi32, #tpu.memory_space<vmem>>, vector<1x8xi32>,
    return
  }
  func.func @transform_0(%arg0: i32) -> (i32, i32) {
    %c0_i32 = arith.constant 0 : i32
    %c0_i32_0 = arith.constant 0 : i32
    return %c0_i32, %arg0 : i32, i32
  }
  func.func @transform_1(%arg0: i32) -> (i32, i32) {
    %c0_i32 = arith.constant 0 : i32
    %c0_i32_0 = arith.constant 0 : i32
    %c0_i32_1 = arith.constant 0 : i32
    return %c0_i32, %c0_i32_0 : i32, i32
  }
  func.func @transform_2(%arg0: i32) -> (i32, i32) {
    %c0_i32 = arith.constant 0 : i32
    %c0_i32_0 = arith.constant 0 : i32
    %c0_i32_1 = arith.constant 0 : i32
    return %c0_i32, %c0_i32_0 : i32, i32
  }
  func.func @transform_3(%arg0: i32) -> (i32, i32) {
    %c0_i32 = arith.constant 0 : i32
    %c0_i32_0 = arith.constant 0 : i32
    %c0_i32_1 = arith.constant 0 : i32
    return %c0_i32, %c0_i32_0 : i32, i32
  }
  func.func @transform_4(%arg0: i32) -> (i32, i32) {
    %c0_i32 = arith.constant 0 : i32
    %c0_i32_0 = arith.constant 0 : i32
    %c0_i32_1 = arith.constant 0 : i32
    return %c0_i32, %c0_i32_0 : i32, i32
  }
  func.func @transform_5(%arg0: i32) -> (i32, i32) {
    %c0_i32 = arith.constant 0 : i32
    %c0_i32_0 = arith.constant 0 : i32
    return %c0_i32, %arg0 : i32, i32
  }
}

</mosaic_0001>

<llo_original>
// kernel: spcl_forward.1
$region0: #{spcl_forward.1}
  #allocation0 [shape = 'u32[]', space=smem, size = 0x4, offset = 0x4, fixed_abs, tag = 'smem constant byte address 0x4 - core index']
  #allocation1 [shape = 'u32[144,128]{1,0:T(1,128)}', space=vmem, size = 0x12000, scoped, tag = 'internal scratch']
  %s0 = inlined_call_operand.vmem [shape: f32[32,8], index: 0, kind: input, shape index: {}]
  %s1 = inlined_call_operand.vmem [shape: bf16[32,32], index: 1, kind: input, shape index: {}]
  %s2 = inlined_call_operand.vmem [shape: f32[32,1], index: 2, kind: input, shape index: {}]
  %s3 = inlined_call_operand.vmem [shape: bf16[16,32], index: 3, kind: input, shape index: {}]
  %s4 = inlined_call_operand.vmem [shape: f32[16,1], index: 4, kind: input, shape index: {}]
  %s5 = inlined_call_operand.vmem [shape: s32[2,8], index: 5, kind: output, shape index: {}]
  %s6 = sld [smem:[#allocation0]]
  $region30: #{spcl_forward.1} parent=0
    _
  %s8 = ssub.s32 1, %s6
  %s9 = scalar_select 0, %s8, %s6
  // Predicated region
  $region2: #{spcl_forward.1} parent=0 // pred_check
    _
  $region3: #{spcl_forward.1} parent=0 // pred_check_branch
    %11 = sbr.rel (0) target = $region5
  $region4: #{spcl_forward.1} parent=0 // pred_region
    _
  $region5: #{spcl_forward.1} parent=0 // pred_fallthru
    _
  // Predicated region
  $region6: #{spcl_forward.1} parent=0 // pred_check
    _
  $region7: #{spcl_forward.1} parent=0 // pred_check_branch
    %13 = sbr.rel (0) target = $region9
  $region8: #{spcl_forward.1} parent=0 // pred_region
    _
  $region9: #{spcl_forward.1} parent=0 // pred_fallthru
    _
  // Predicated region
  $region10: #{spcl_forward.1} parent=0 // pred_check
    _
  $region11: #{spcl_forward.1} parent=0 // pred_check_branch
    %15 = sbr.rel (0) target = $region13
  $region12: #{spcl_forward.1} parent=0 // pred_region
    _
  $region13: #{spcl_forward.1} parent=0 // pred_fallthru
    _
  // Predicated region
  $region14: #{spcl_forward.1} parent=0 // pred_check
    _
  $region15: #{spcl_forward.1} parent=0 // pred_check_branch
    %17 = sbr.rel (0) target = $region17
  $region16: #{spcl_forward.1} parent=0 // pred_region
    _
  $region17: #{spcl_forward.1} parent=0 // pred_fallthru
    _
  // Predicated region
  $region18: #{spcl_forward.1} parent=0 // pred_check
    _
  $region19: #{spcl_forward.1} parent=0 // pred_check_branch
    %19 = sbr.rel (0) target = $region21
  $region20: #{spcl_forward.1} parent=0 // pred_region
    _
  $region21: #{spcl_forward.1} parent=0 // pred_fallthru
    _
  %v21 = vld [vmem:[%s0] sm:$0xff]
  %v22 = vld [vmem:[%s0 + $0x8] sm:$0xff]
  %v23 = vld [vmem:[%s0 + $0x10] sm:$0xff]
  %v24 = vld [vmem:[%s0 + $0x18] sm:$0xff]
  %v25 = vpack.c.bf16 %v22, %v21
  %v26 = vpack.c.bf16 %v24, %v23
  %v27 = vld [vmem:[%s1] sm:$0xf]
  %v28 = vld [vmem:[%s1 + $0x4] sm:$0xf]
  %v29 = vld [vmem:[%s1 + $0x8] sm:$0xf]
  %v30 = vld [vmem:[%s1 + $0xc] sm:$0xf]
  %v31 = vld [vmem:[%s2] sm:$0xff]
  %v32 = vld [vmem:[%s2 + $0x8] sm:$0xff]
  %v33 = vld [vmem:[%s2 + $0x10] sm:$0xff]
  %v34 = vld [vmem:[%s2 + $0x18] sm:$0xff]
  %36 = vset.pattern.permute.xlu0 0
  %37 = vperm.xlu0 %36, %v31
  %v38 = vpop.permute.xlu0 %37
  %41 = vset.pattern.permute.xlu0 0
  %42 = vperm.xlu0 %41, %v32
  %v43 = vpop.permute.xlu0 %42
  %46 = vset.pattern.permute.xlu0 0
  %47 = vperm.xlu0 %46, %v33
  %v48 = vpop.permute.xlu0 %47
  %51 = vset.pattern.permute.xlu0 0
  %52 = vperm.xlu0 %51, %v34
  %v53 = vpop.permute.xlu0 %52
  %v59 = vunpack.c.l.b16 %v27
  %v60 = vunpack.c.l.b16 %v28
  %v61 = vunpack.c.l.b16 %v29
  %v62 = vunpack.c.l.b16 %v30
  %v63 = vpack.c.b16 %v60, %v59
  %v64 = vpack.c.b16 %v62, %v61
  %vm65 = vcmask 261120
  %v67 = vsel %vm65, %v63, 0
  %v70 = vsel %vm65, %v64, 0
  %72 = vmatprep.subr.bf16.mxu0 0
  %73 = vmatpush1.bf16.msra.mxu0 %v25
  %74 = vmatprep.subr.bf16.mxu0 0
  %75 = vmatpush1.bf16.msra.mxu0 %v26
  %76 = vmatprep.subr.bf16.mxu0 0
  %77 = vmatpush1.bf16.msra.mxu0 0
  %78 = vmatprep.subr.bf16.mxu0 0
  %79 = vmatpush1.bf16.msra.mxu0 0
  %80 = vmatprep.subr.bf16.mxu0 0
  %81 = vmatpush1.bf16.msra.mxu0 0
  %82 = vmatprep.subr.bf16.mxu0 0
  %83 = vmatpush1.bf16.msra.mxu0 0
  %84 = vmatprep.subr.bf16.mxu0 0
  %85 = vmatpush1.bf16.msra.mxu0 0
  %86 = vmatprep.subr.bf16.mxu0 0
  %87 = vmatpush1.bf16.msra.mxu0 0
  %88 = vmatprep.subr.bf16.mxu0 0
  %89 = vmatpush1.bf16.msra.mxu0 0
  %90 = vmatprep.subr.bf16.mxu0 0
  %91 = vmatpush1.bf16.msra.mxu0 0
  %92 = vmatprep.subr.bf16.mxu0 0
  %93 = vmatpush1.bf16.msra.mxu0 0
  %94 = vmatprep.subr.bf16.mxu0 0
  %95 = vmatpush1.bf16.msra.mxu0 0
  %96 = vmatprep.subr.bf16.mxu0 0
  %97 = vmatpush1.bf16.msra.mxu0 0
  %98 = vmatprep.subr.bf16.mxu0 0
  %99 = vmatpush1.bf16.msra.mxu0 0
  %100 = vmatprep.subr.bf16.mxu0 0
  %101 = vmatpush1.bf16.msra.mxu0 0
  %102 = vmatprep.subr.bf16.mxu0 0
  %103 = vmatpush1.bf16.msra.mxu0 0
  %104 = vmatprep.mubr.bf16.mxu0 0
  %105 = vmatmul.mubr.bf16.gmra.mrb[0].mxu0 %v67
  %v106 = vpop.f32.mrb[0].mxu0
  %v107 = vadd.f32 %v38, %v106
  %v108 = vpop.f32.mrb[0].mxu0
  %v109 = vpop.f32.mrb[0].mxu0
  %v110 = vadd.f32 %v43, %v109
  %v111 = vpop.f32.mrb[0].mxu0
  %112 = vmatprep.mubr.bf16.mxu0 0
  %113 = vmatmul.mubr.bf16.gmra.mrb[0].mxu0 %v70
  %v114 = vpop.f32.mrb[0].mxu0
  %v115 = vadd.f32 %v48, %v114
  %v116 = vpop.f32.mrb[0].mxu0
  %v117 = vpop.f32.mrb[0].mxu0
  %v118 = vadd.f32 %v53, %v117
  %v119 = vpop.f32.mrb[0].mxu0
  %120 = vdwg.mxu0
  %v121 = vmul.f32 %v107, %v107
  %v122 = vmul.f32 %v110, %v110
  %v123 = vmul.f32 %v115, %v115
  %v124 = vmul.f32 %v118, %v118
  %vm125 = vcmask 64512
  %v126 = vsel %vm125, %v121, 0.0
  %v127 = vsel %vm125, %v122, 0.0
  %v128 = vadd.f32 %v126, %v127
  %v129 = vsel %vm125, %v123, 0.0
  %v130 = vadd.f32 %v128, %v129
  %v131 = vsel %vm125, %v124, 0.0
  %v132 = vadd.f32 %v130, %v131
  %v133 = vrot.slane %v132, 4
  %v134 = vadd.f32 %v132, %v133
  %v135 = vrot.slane %v134, 2
  %v136 = vadd.f32 %v134, %v135
  %v137 = vrot.slane %v136, 1
  %v138 = vadd.f32 %v136, %v137
  %v139 = vmax.f32 %v138, 1e-16
  %v140 = vrsqrt.pop %v139
  %v141 = vld [vmem:[%s3] sm:$0xf]
  %v142 = vld [vmem:[%s3 + $0x4] sm:$0xf]
  %v143 = vpack.c.bf16 %v110, %v107
  %v144 = vpack.c.bf16 %v118, %v115
  %v147 = vunpack.c.l.b16 %v141
  %v148 = vunpack.c.l.b16 %v142
  %v149 = vpack.c.b16 %v148, %v147
  %v151 = vsel %vm65, %v149, 0
  %153 = vmatprep.subr.bf16.mxu0 0
  %154 = vmatpush1.bf16.msra.mxu0 %v143
  %155 = vmatprep.subr.bf16.mxu0 0
  %156 = vmatpush1.bf16.msra.mxu0 %v144
  %157 = vmatprep.subr.bf16.mxu0 0
  %158 = vmatpush1.bf16.msra.mxu0 0
  %159 = vmatprep.subr.bf16.mxu0 0
  %160 = vmatpush1.bf16.msra.mxu0 0
  %161 = vmatprep.subr.bf16.mxu0 0
  %162 = vmatpush1.bf16.msra.mxu0 0
  %163 = vmatprep.subr.bf16.mxu0 0
  %164 = vmatpush1.bf16.msra.mxu0 0
  %165 = vmatprep.subr.bf16.mxu0 0
  %166 = vmatpush1.bf16.msra.mxu0 0
  %167 = vmatprep.subr.bf16.mxu0 0
  %168 = vmatpush1.bf16.msra.mxu0 0
  %169 = vmatprep.subr.bf16.mxu0 0
  %170 = vmatpush1.bf16.msra.mxu0 0
  %171 = vmatprep.subr.bf16.mxu0 0
  %172 = vmatpush1.bf16.msra.mxu0 0
  %173 = vmatprep.subr.bf16.mxu0 0
  %174 = vmatpush1.bf16.msra.mxu0 0
  %175 = vmatprep.subr.bf16.mxu0 0
  %176 = vmatpush1.bf16.msra.mxu0 0
  %177 = vmatprep.subr.bf16.mxu0 0
  %178 = vmatpush1.bf16.msra.mxu0 0
  %179 = vmatprep.subr.bf16.mxu0 0
  %180 = vmatpush1.bf16.msra.mxu0 0
  %181 = vmatprep.subr.bf16.mxu0 0
  %182 = vmatpush1.bf16.msra.mxu0 0
  %183 = vmatprep.subr.bf16.mxu0 0
  %184 = vmatpush1.bf16.msra.mxu0 0
  %185 = vmatprep.mubr.bf16.mxu0 0
  %186 = vmatmul.mubr.bf16.gmra.mrb[0].mxu0 %v151
  %v187 = vpop.f32.mrb[0].mxu0
  %v188 = vadd.f32 0.0, %v187
  %v189 = vpop.f32.mrb[0].mxu0
  %v190 = vpop.f32.mrb[0].mxu0
  %v191 = vadd.f32 0.0, %v190
  %v192 = vpop.f32.mrb[0].mxu0
  %193 = vdwg.mxu0
  %v194 = vld [vmem:[%s4] sm:$0xff]
  %v195 = vld [vmem:[%s4 + $0x8] sm:$0xff]
  %v196 = vmul.f32 %v188, %v140
  %198 = vset.pattern.permute.xlu0 0
  %199 = vperm.xlu0 %198, %v194
  %v200 = vpop.permute.xlu0 %199
  %v202 = vadd.f32 %v196, %v200
  %204 = vset.pattern.permute.xlu0 0
  %205 = vperm.xlu0 %204, %v195
  %v206 = vpop.permute.xlu0 %205
  %v208 = vadd.f32 %v191, %v206
  %v209 = vsel %vm125, %v208, -inf
  %v210 = vrot.slane %v209, 4
  %v211 = vmax.f32 %v209, %v210
  %v212 = vrot.slane %v211, 2
  %v213 = vmax.f32 %v211, %v212
  %v214 = vrot.slane %v213, 1
  %v215 = vmax.f32 %v213, %v214
  %v216 = vlaneseq
  %v217 = vshrl.u32 %v216, 7
  %vm218 = vcmp.eq.f32.partialorder %v208, %v215
  %v219 = vsel %vm218, %v217, 1073741824
  %v220 = vsel %vm125, %v219, 2147483647
  %v221 = vrot.slane %v220, 4
  %vm222 = vcmp.lt.s32.totalorder %v220, %v221
  %v223 = vsel %vm222, %v220, %v221
  %v224 = vrot.slane %v223, 2
  %vm225 = vcmp.lt.s32.totalorder %v223, %v224
  %v226 = vsel %vm225, %v223, %v224
  %v227 = vrot.slane %v226, 1
  %vm228 = vcmp.lt.s32.totalorder %v226, %v227
  %v229 = vsel %vm228, %v226, %v227
  %vm230 = vcmask 57344
  %231 = vst.msk [vmem:[%s5] sm:$0x1] %vm230, %v229
  %v232 = vsel %vm125, %v202, -inf
  %v233 = vrot.slane %v232, 4
  %v234 = vmax.f32 %v232, %v233
  %v235 = vrot.slane %v234, 2
  %v236 = vmax.f32 %v234, %v235
  %v237 = vrot.slane %v236, 1
  %v238 = vmax.f32 %v236, %v237
  %vm239 = vcmp.eq.f32.partialorder %v202, %v238
  %v240 = vsel %vm239, %v217, 1073741824
  %v241 = vsel %vm125, %v240, 2147483647
  %v242 = vrot.slane %v241, 4
  %vm243 = vcmp.lt.s32.totalorder %v241, %v242
  %v244 = vsel %vm243, %v241, %v242
  %v245 = vrot.slane %v244, 2
  %vm246 = vcmp.lt.s32.totalorder %v244, %v245
  %v247 = vsel %vm246, %v244, %v245
  %v248 = vrot.slane %v247, 1
  %vm249 = vcmp.lt.s32.totalorder %v247, %v248
  %v250 = vsel %vm249, %v247, %v248
  %251 = vst.msk [vmem:[%s5 + $0x1] sm:$0x1] %vm230, %v250
  // Predicated region
  $region22: #{spcl_forward.1} parent=0 // pred_check
    _
  $region23: #{spcl_forward.1} parent=0 // pred_check_branch
    %253 = sbr.rel (0) target = $region25
  $region24: #{spcl_forward.1} parent=0 // pred_region
    _
  $region25: #{spcl_forward.1} parent=0 // pred_fallthru
    _
  // Predicated region
  $region26: #{spcl_forward.1} parent=0 // pred_check
    _
  $region27: #{spcl_forward.1} parent=0 // pred_check_branch
    %255 = sbr.rel (0) target = $region29
  $region28: #{spcl_forward.1} parent=0 // pred_region
    _
  $region29: #{spcl_forward.1} parent=0 // pred_fallthru
    _

</llo_original>
